<compile_context>
chip_gen: v6e
topology: v6e:2x2x1
jax: 0.10.0
libtpu: 0.0.40
codegen_flags: <defaults>
</compile_context>

<pallas_src>
import math

import jax
import jax.numpy as jnp
from jax.experimental import pallas as pl
from jax.experimental.pallas import tpu as pltpu


def _round_up(a: int, m: int) -> int:
    return (a + m - 1) // m * m


def _make_skip_linear_kernel(add_skip: bool, skip_cols: int, mxu_dtype):
    """y = x @ w + b, optionally fused with the skip add (skip_cols == N)."""

    def kernel(x_ref, w_ref, b_ref, o_ref):
        x = x_ref[...]                                   # (TM, K) f32
        xm = x if mxu_dtype is None else x.astype(mxu_dtype)
        y = jnp.dot(xm, w_ref[...],                      # MXU, f32 accumulate
                    preferred_element_type=jnp.float32)
        y = y + b_ref[...]                               # bias in f32
        if add_skip:
            y = y + x[:, :skip_cols]                     # exact f32 skip add
        o_ref[...] = y.astype(o_ref.dtype)

    return kernel


def prepare_skip_linear_params(w, b, *, mxu_dtype=jnp.bfloat16):
    """One-time parameter prep (hoisted out of the per-call forward).

    w: (K, N) transposed PyTorch Linear weight; cast once to the MXU dtype.
    b: (N,)   bias, kept f32 and reshaped to a (1, N) broadcast row.
    """
    K, N = w.shape
    assert b.shape == (N,)
    w_p = w if mxu_dtype is None else w.astype(mxu_dtype)
    b_p = b.astype(jnp.float32).reshape(1, N)
    return w_p, b_p


def _choose_tm(M: int, K: int, N: int, w_itemsize: int) -> int:
    """Row-tile size: big enough for HBM roofline, small enough to pipeline."""
    if M <= 8:
        return M                         # one tiny block (== full array dim)
    TM_CAP = 512                         # 256-512 already ~85% of HBM roofline
    # Aim for >= ~8 grid steps so the DMA pipeline has a steady state and both
    # v7x TensorCores get >= 4 tiles each.
    tm_steps = _round_up(pl.cdiv(M, 8), 8)
    # Conservative VMEM data budget (v7x scoped default is 32 MiB of 64 MiB).
    budget = 12 * 1024 * 1024
    fixed = 2 * (K * N * w_itemsize + N * 4)        # W + b (double-buffered)
    per_row = 2 * 4 * (K + N)                       # x in + out, f32, dbl-buf
    tm_vmem = max(8, (budget - fixed) // per_row // 8 * 8)
    return max(8, min(TM_CAP, tm_steps, tm_vmem, _round_up(M, 8)))


def skip_connection_linear(x, w_p, b_p, *, mxu_dtype=jnp.bfloat16):
    """SkipConnection(nn.Linear(K, N)) forward.

    x:   (..., K) float32
    w_p: (K, N)   prepared weight (see prepare_skip_linear_params)
    b_p: (1, N)   prepared bias
    """
    K = x.shape[-1]
    N = w_p.shape[-1]
    assert w_p.shape[0] == K and b_p.shape == (1, N)
    lead = x.shape[:-1]
    M = math.prod(lead) if lead else 1

    # SkipConnection branch (static): K < N -> y only ; else x[..., :N] + y.
    add_skip = not (K < N)
    skip_cols = N if add_skip else 0

    w_itemsize = jnp.dtype(w_p.dtype).itemsize
    # Resident weight (double-buffered by default) must fit the VMEM budget.
    assert 2 * K * N * w_itemsize <= 24 * 1024 * 1024, "weight needs K-tiling"

    x2 = x.reshape(M, K)                       # flatten leading dims to rows
    TM = _choose_tm(M, K, N, w_itemsize)
    grid_m = pl.cdiv(M, TM)                    # ragged last tile is masked

    kernel = _make_skip_linear_kernel(add_skip, skip_cols, mxu_dtype)

    out = pl.pallas_call(
        kernel,
        out_shape=jax.ShapeDtypeStruct((M, N), x.dtype),
        grid_spec=pltpu.PrefetchScalarGridSpec(
            num_scalar_prefetch=0,
            grid=(grid_m,),
            in_specs=[
                pl.BlockSpec((TM, K), lambda i: (i, 0)),   # x tile (streamed)
                pl.BlockSpec((K, N), lambda i: (0, 0)),    # W resident
                pl.BlockSpec((1, N), lambda i: (0, 0)),    # b resident
            ],
            out_specs=pl.BlockSpec((TM, N), lambda i: (i, 0)),
        ),
        compiler_params=pltpu.CompilerParams(
            dimension_semantics=("parallel",),   # shard M tiles across v7x TCs
            vmem_limit_bytes=32 * 1024 * 1024,
        ),
    )(x2, w_p, b_p)

    return out.reshape(*lead, N)


# ----------------------------- references -----------------------------------
def _reference_f32(x, w, b):
    """Pure-JAX f32 reference mirroring the PyTorch forward exactly."""
    y = jnp.einsum("...k,kn->...n", x, w,
                   preferred_element_type=jnp.float32) + b
    if x.shape[-1] < y.shape[-1]:
        return y
    if x.shape == y.shape:
        return x + y
    return x[..., : y.shape[-1]] + y


def _reference_mxu(x, w, b, mxu_dtype):
    """Reference with the same bf16-operand / f32-accumulate matmul numerics."""
    y = jnp.einsum("...k,kn->...n", x.astype(mxu_dtype), w.astype(mxu_dtype),
                   preferred_element_type=jnp.float32) + b
    if x.shape[-1] < y.shape[-1]:
        return y
    if x.shape == y.shape:
        return x + y
    return x[..., : y.shape[-1]] + y


if __name__ == "__main__":
    key = jax.random.PRNGKey(0)
    kx, kxl, kw1, kb1, kw2, kb2, kw3, kb3 = jax.random.split(key, 8)

    batch, seq, hidden = 2, 8, 32
    x_small = jax.random.normal(kx, (batch, seq, hidden), dtype=jnp.float32)
    # Larger row count to exercise the multi-tile grid + ragged last tile.
    x_large = jax.random.normal(kxl, (4, 500, hidden), dtype=jnp.float32)

    # Three configurations exercising the three branches of SkipConnection.
    configs = [
        ("expand  (y only)      ", kw1, kb1, 64),  # K < N  -> y
        ("same    (x + y)       ", kw2, kb2, 32),  # equal  -> x + y
        ("shrink  (x[..:N] + y) ", kw3, kb3, 16),  # K > N  -> x[..., :N] + y
    ]

    for name, kw, kb, out_features in configs:
        w = (jax.random.normal(kw, (hidden, out_features), dtype=jnp.float32)
             * (1.0 / jnp.sqrt(hidden)))
        b = jax.random.normal(kb, (out_features,), dtype=jnp.float32) * 0.01

        # One-time parameter prep (bf16 cast hoisted out of the forward pass).
        w_p, b_p = prepare_skip_linear_params(w, b, mxu_dtype=jnp.bfloat16)

        for x in (x_small, x_large):
            out = jax.block_until_ready(skip_connection_linear(x, w_p, b_p))

            ref_mxu = _reference_mxu(x, w, b, jnp.bfloat16)
            ref_f32 = _reference_f32(x, w, b)
            assert out.shape == ref_f32.shape, (name, out.shape, ref_f32.shape)
            # Tight check against a reference with identical matmul numerics.
            assert jnp.allclose(out, ref_mxu, atol=1e-3, rtol=1e-3), name
            # Loose check against the exact-f32 PyTorch semantics
            # (difference is only the bf16 MXU operand rounding).
            assert jnp.allclose(out, ref_f32, atol=5e-2, rtol=5e-2), name

    print("KERNEL_OK")
</pallas_src>

<mosaic_0001>
module attributes {stable_mosaic.version = 11 : i64} {
  func.func @kernel(%arg0: i32, %arg1: memref<8x32xf32, #tpu.memory_space<vmem>>, %arg2: memref<32x64xbf16, #tpu.memory_space<vmem>>, %arg3: memref<1x64xf32, #tpu.memory_space<vmem>>, %arg4: memref<8x64xf32, #tpu.memory_space<vmem>>) attributes {dimension_semantics = [#tpu.dimension_semantics<parallel>], iteration_bounds = array<i64: 2>, scalar_prefetch = 0 : i64, scratch_operands = 0 : i64, tpu.core_type = #tpu.core_type<tc>, window_params = [{transform_indices = @transform_0, window_bounds = array<i64: 8, 32>}, {pipeline_mode = #tpu.pipeline_mode<synchronous>, transform_indices = @transform_1, window_bounds = array<i64: 32, 64>}, {pipeline_mode = #tpu.pipeline_mode<synchronous>, transform_indices = @transform_2, window_bounds = array<i64: 1, 64>}, {transform_indices = @transform_3, window_bounds = array<i64: 8, 64>}]} {
    %c0 = arith.constant 0 : index
    %c0_0 = arith.constant 0 : index
    %0 = vector.load %arg1[%c0, %c0_0] : memref<8x32xf32, #tpu.memory_space<vmem>>, vector<8x32xf32>
    %1 = arith.truncf %0 : vector<8x32xf32> to vector<8x32xbf16>
    %c0_1 = arith.constant 0 : index
    %c0_2 = arith.constant 0 : index
    %2 = vector.load %arg2[%c0_1, %c0_2] : memref<32x64xbf16, #tpu.memory_space<vmem>>, vector<32x64xbf16>
    %cst = arith.constant dense<0.000000e+00> : vector<8x64xf32>
    %3 = tpu.matmul %1, %2, %cst {dimension_numbers = #tpu.dot_dimension_numbers<[1], [0], [0], [1], [0, 0, 1, 1], [], []>} : vector<8x32xbf16>, vector<32x64xbf16>, vector<8x64xf32> -> vector<8x64xf32>
    %c0_3 = arith.constant 0 : index
    %c0_4 = arith.constant 0 : index
    %4 = vector.load %arg3[%c0_3, %c0_4] : memref<1x64xf32, #tpu.memory_space<vmem>>, vector<1x64xf32>
    %5 = vector.broadcast %4 : vector<1x64xf32> to vector<8x64xf32>
    %6 = arith.addf %3, %5 : vector<8x64xf32>
    %c0_5 = arith.constant 0 : index
    %c0_6 = arith.constant 0 : index
    %7 = vector.load %arg4[%c0_5, %c0_6] : memref<8x64xf32, #tpu.memory_space<vmem>>, vector<8x64xf32>
    tpu.vector_store %arg4[%c0_5, %c0_6], %6 {strides = array<i32>} : memref<8x64xf32, #tpu.memory_space<vmem>>, vector<8x64xf32>,
    return
  }
  func.func @transform_0(%arg0: i32) -> (i32, i32) {
    %c0_i32 = arith.constant 0 : i32
    %c0_i32_0 = arith.constant 0 : i32
    return %arg0, %c0_i32 : i32, i32
  }
  func.func @transform_1(%arg0: i32) -> (i32, i32) {
    %c0_i32 = arith.constant 0 : i32
    %c0_i32_0 = arith.constant 0 : i32
    %c0_i32_1 = arith.constant 0 : i32
    return %c0_i32, %c0_i32_0 : i32, i32
  }
  func.func @transform_2(%arg0: i32) -> (i32, i32) {
    %c0_i32 = arith.constant 0 : i32
    %c0_i32_0 = arith.constant 0 : i32
    %c0_i32_1 = arith.constant 0 : i32
    return %c0_i32, %c0_i32_0 : i32, i32
  }
  func.func @transform_3(%arg0: i32) -> (i32, i32) {
    %c0_i32 = arith.constant 0 : i32
    %c0_i32_0 = arith.constant 0 : i32
    return %arg0, %c0_i32 : i32, i32
  }
}

</mosaic_0001>

<llo_original>
// kernel: tpu_custom_call.1
$region0: #{tpu_custom_call.1}
  #allocation0 [shape = 'u32[]', space=smem, size = 0x4, offset = 0x4, fixed_abs, tag = 'smem constant byte address 0x4 - core index']
  #allocation1 [shape = 'u32[144,128]{1,0:T(1,128)}', space=vmem, size = 0x12000, scoped, tag = 'internal scratch']
  %s0 = inlined_call_operand.hbm [shape: f32[16,32], index: 0, kind: input, shape index: {}]
  %s1 = inlined_call_operand.hbm [shape: bf16[32,64], index: 1, kind: input, shape index: {}]
  %s2 = inlined_call_operand.vmem [shape: f32[1,64], index: 2, kind: input, shape index: {}]
  %s3 = inlined_call_operand.hbm [shape: f32[16,64], index: 3, kind: output, shape index: {}]
  %s4 = sld [smem:[#allocation0]]
  $region53: #{tpu_custom_call.1} parent=0
    _
  %s6 = ssub.s32 1, %s4
  %s7 = scalar_select 0, %s6, %s4
  $region1: #{tpu_custom_call.1} parent=0
    #allocation2 [shape = 'u8[8192]{0}', space=vmem, size = 0x2000, scoped, tag = 'input window, operand 0']
    #allocation3 [shape = 's32[2]{0}', space=sflag, size = 0x8, scoped, tag = 'scoped memory for tpu_custom_call.1']
    #allocation4 [shape = 's32[2]{0}', space=sflag, size = 0x8, scoped, tag = 'scoped memory for tpu_custom_call.1']
    #allocation5 [shape = 'u8[8192]{0}', space=vmem, size = 0x2000, scoped, tag = 'input window, operand 1, single buffered']
    #allocation6 [shape = 's32[1]{0}', space=sflag, size = 0x4, scoped, tag = 'scoped memory for tpu_custom_call.1']
    #allocation7 [shape = 'u8[8192]{0}', space=vmem, size = 0x2000, scoped, tag = 'output window, operand 0']
    %8 = vsyncpa [#allocation3], 0
    %s9 = scalar_lea.sflag [#allocation3], 1
    %10 = vsyncpa %s9, 0
    %11 = vsyncpa [#allocation6], 0
    %12 = vsyncpa [#allocation4], 0
    %s13 = scalar_lea.sflag [#allocation4], 1
    %14 = vsyncpa %s13, 0
    loop: start=0, step=1, limit=4
    $region2: #{tpu_custom_call.1} parent=1 // loop_pre_header
      _
    $region3: #{tpu_custom_call.1} parent=1 // loop_header
      %s16 = sphi 0, %s20
      %p17 = scmp.ge.s32.totalorder %s16, 4
      %s26 = sphi 0, %s28
      %s29 = sphi 0, %s26
      %s30 = sphi 0, %s29
      %s46 = sphi 0, %s30
      %s50 = sphi 0, %s50
      %s52 = sphi 0, %s50
      %s53 = sphi 0, %s52
      %s67 = sphi 0, %s53
      %s71 = sphi 0, %s71
      %s73 = sphi 0, %s71
      %s74 = sphi 0, %s73
      %s88 = sphi 0, %s74
      %s94 = sphi 0, %s96
      %s97 = sphi 0, %s94
      %s98 = sphi 0, %s97
      %s114 = sphi 0, %s98
    $region4: #{tpu_custom_call.1} parent=1 // loop_header_branch
      %19 = sbr.rel (%p17) target = $region8
    $region5: #{tpu_custom_call.1} parent=1 // loop_body
      %s21 = ssub.s32 %s16, 1
      %s22 = ssub.s32 %s16, 2
      %s23 = sadd.s32 %s16, 1
      %s24 = ssub.s32 %s16, %s23
      %p25 = scmp.eq.s32.totalorder %s24, 0
      %s27 = sadd.s32 %s26, 1
      %s28 = scalar_select %p25, %s26, %s27
      %p31 = pneg %p25
      %p32 = scmp.eq.s32.totalorder %s16, 1
      %p33 = por %p31, %p32
      %p34 = scmp.ne.s32.totalorder %s26, %s29
      %p35 = scmp.eq.s32.totalorder %s16, 0
      %p36 = por %p34, %p35
      %p37 = scmp.ne.s32.totalorder %s26, %s29
      %p38 = scmp.eq.s32.totalorder %s21, 1
      %p39 = por %p37, %p38
      %p40 = scmp.ne.s32.totalorder %s29, %s30
      %p41 = scmp.eq.s32.totalorder %s21, 0
      %p42 = por %p40, %p41
      %p43 = scmp.ne.s32.totalorder %s29, %s30
      %p44 = scmp.eq.s32.totalorder %s22, 1
      %p45 = por %p43, %p44
      %p47 = scmp.ne.s32.totalorder %s30, %s46
      %p48 = scmp.eq.s32.totalorder %s22, 0
      %p49 = por %p47, %p48
      %s51 = sadd.s32 %s50, 1
      %p54 = scmp.eq.s32.totalorder %s16, 1
      %p55 = scmp.ne.s32.totalorder %s50, %s52
      %p56 = scmp.eq.s32.totalorder %s16, 0
      %p57 = por %p55, %p56
      %p58 = scmp.ne.s32.totalorder %s50, %s52
      %p59 = scmp.eq.s32.totalorder %s21, 1
      %p60 = por %p58, %p59
      %p61 = scmp.ne.s32.totalorder %s52, %s53
      %p62 = scmp.eq.s32.totalorder %s21, 0
      %p63 = por %p61, %p62
      %p64 = scmp.ne.s32.totalorder %s52, %s53
      %p65 = scmp.eq.s32.totalorder %s22, 1
      %p66 = por %p64, %p65
      %p68 = scmp.ne.s32.totalorder %s53, %s67
      %p69 = scmp.eq.s32.totalorder %s22, 0
      %p70 = por %p68, %p69
      %s72 = sadd.s32 %s71, 1
      %p75 = scmp.eq.s32.totalorder %s16, 1
      %p76 = scmp.ne.s32.totalorder %s71, %s73
      %p77 = scmp.eq.s32.totalorder %s16, 0
      %p78 = por %p76, %p77
      %p79 = scmp.ne.s32.totalorder %s71, %s73
      %p80 = scmp.eq.s32.totalorder %s21, 1
      %p81 = por %p79, %p80
      %p82 = scmp.ne.s32.totalorder %s73, %s74
      %p83 = scmp.eq.s32.totalorder %s21, 0
      %p84 = por %p82, %p83
      %p85 = scmp.ne.s32.totalorder %s73, %s74
      %p86 = scmp.eq.s32.totalorder %s22, 1
      %p87 = por %p85, %p86
      %p89 = scmp.ne.s32.totalorder %s74, %s88
      %p90 = scmp.eq.s32.totalorder %s22, 0
      %p91 = por %p89, %p90
      %s92 = ssub.s32 %s16, %s23
      %p93 = scmp.eq.s32.totalorder %s92, 0
      %s95 = sadd.s32 %s94, 1
      %s96 = scalar_select %p93, %s94, %s95
      %p99 = pneg %p93
      %p100 = scmp.eq.s32.totalorder %s16, 1
      %p101 = por %p99, %p100
      %p102 = scmp.ne.s32.totalorder %s94, %s97
      %p103 = scmp.eq.s32.totalorder %s16, 0
      %p104 = por %p102, %p103
      %p105 = scmp.ne.s32.totalorder %s94, %s97
      %p106 = scmp.eq.s32.totalorder %s21, 1
      %p107 = por %p105, %p106
      %p108 = scmp.ne.s32.totalorder %s97, %s98
      %p109 = scmp.eq.s32.totalorder %s21, 0
      %p110 = por %p108, %p109
      %p111 = scmp.ne.s32.totalorder %s97, %s98
      %p112 = scmp.eq.s32.totalorder %s22, 1
      %p113 = por %p111, %p112
      %p115 = scmp.ne.s32.totalorder %s98, %s114
      %p116 = scmp.eq.s32.totalorder %s22, 0
      %p117 = por %p115, %p116
      %p118 = scmp.le.s32.totalorder 1, %s16
      %p119 = scmp.lt.s32.totalorder %s16, 3
      %p120 = pnand %p118, %p119
      %p121 = pneg %p120
      // Predicated region
      $region9: #{tpu_custom_call.1} parent=5 // pred_check
        _
      $region10: #{tpu_custom_call.1} parent=5 // pred_check_branch
        %123 = sbr.rel (%p120) target = $region12
      $region11: #{tpu_custom_call.1} parent=5 // pred_region
        %s124 = ssub.s32 %s16, 1
        // Predicated region
        $region13: #{tpu_custom_call.1} parent=11 // pred_check
          %p125 = pneg %p63
        $region14: #{tpu_custom_call.1} parent=11 // pred_check_branch
          %127 = sbr.rel (%p125) target = $region16
        $region15: #{tpu_custom_call.1} parent=11 // pred_region
          %s129 = ssub.s32 256, 256
          %130 = vsyncadd [#allocation6], %s129
          %s131 = sshll.u32 [#allocation5], 4
          %s132 = int_to_ptr.vmem [resolvable:$true] %s131
          %137 = dma.hbm_to_vmem [thread:$0]  %s1, 256, %s132, [#allocation6], 64, 64, 4
        $region16: #{tpu_custom_call.1} parent=11 // pred_fallthru
          _
        // Predicated region
        $region17: #{tpu_custom_call.1} parent=11 // pred_check
          %p138 = pneg %p84
        $region18: #{tpu_custom_call.1} parent=11 // pred_check_branch
          %140 = sbr.rel (%p138) target = $region20
        $region19: #{tpu_custom_call.1} parent=11 // pred_region
          _
        $region20: #{tpu_custom_call.1} parent=11 // pred_fallthru
          _
      $region12: #{tpu_custom_call.1} parent=5 // pred_fallthru
        _
      %p141 = scmp.lt.s32.totalorder %s16, 2
      // Predicated region
      $region21: #{tpu_custom_call.1} parent=5 // pred_check
        %p142 = pneg %p141
      $region22: #{tpu_custom_call.1} parent=5 // pred_check_branch
        %144 = sbr.rel (%p142) target = $region24
      $region23: #{tpu_custom_call.1} parent=5 // pred_region
        // Predicated region
        $region25: #{tpu_custom_call.1} parent=23 // pred_check
          %p145 = pneg %p36
        $region26: #{tpu_custom_call.1} parent=23 // pred_check_branch
          %147 = sbr.rel (%p145) target = $region28
        $region27: #{tpu_custom_call.1} parent=23 // pred_region
          %s148 = sand.u32 %s26, 1
          %s149 = scalar_lea.sflag [#allocation3], %s148
          %s150 = sand.u32 %s26, 1
          %s151 = smul.addr %s150, 8
          %s152 = scalar_lea.vmem [#allocation2], %s151
          %s154 = ssub.s32 128, 128
          %155 = vsyncadd %s149, %s154
          %s156 = smul.addr %s16, 128
          %s157 = scalar_lea.hbm %s0, %s156
          %s159 = sshll.u32 %s152, 4
          %s160 = int_to_ptr.vmem [resolvable:$true] %s159
          %162 = dma.hbm_to_vmem [thread:$0]  %s157, 128, %s160, %s149
        $region28: #{tpu_custom_call.1} parent=23 // pred_fallthru
          _
      $region24: #{tpu_custom_call.1} parent=5 // pred_fallthru
        _
      %p163 = scmp.le.s32.totalorder 1, %s16
      %p164 = scmp.lt.s32.totalorder %s16, 3
      %p165 = pnand %p163, %p164
      %p166 = pneg %p165
      // Predicated region
      $region29: #{tpu_custom_call.1} parent=5 // pred_check
        _
      $region30: #{tpu_custom_call.1} parent=5 // pred_check_branch
        %168 = sbr.rel (%p165) target = $region32
      $region31: #{tpu_custom_call.1} parent=5 // pred_region
        %s169 = ssub.s32 %s16, 1
        %s170 = sand.u32 %s29, 1
        %s171 = scalar_lea.sflag [#allocation3], %s170
        %s172 = sand.u32 %s29, 1
        %s173 = smul.addr %s172, 8
        %s174 = scalar_lea.vmem [#allocation2], %s173
        // Predicated region
        $region33: #{tpu_custom_call.1} parent=31 // pred_check
          %p175 = pneg %p42
        $region34: #{tpu_custom_call.1} parent=31 // pred_check_branch
          %177 = sbr.rel (%p175) target = $region36
        $region35: #{tpu_custom_call.1} parent=31 // pred_region
          %178 = dma.done %s171, 128
        $region36: #{tpu_custom_call.1} parent=31 // pred_fallthru
          _
        // Predicated region
        $region37: #{tpu_custom_call.1} parent=31 // pred_check
          %p179 = pneg %p63
        $region38: #{tpu_custom_call.1} parent=31 // pred_check_branch
          %181 = sbr.rel (%p179) target = $region40
        $region39: #{tpu_custom_call.1} parent=31 // pred_region
          %182 = dma.done [#allocation6], 256
        $region40: #{tpu_custom_call.1} parent=31 // pred_fallthru
          _
        %s183 = sand.u32 %s29, 1
        %s184 = scalar_lea.sflag [#allocation3], %s183
        %s185 = sand.u32 %s29, 1
        %s186 = smul.addr %s185, 8
        %s187 = scalar_lea.vmem [#allocation2], %s186
        %p188 = pneg %p42
        %p189 = pneg %p39
        %p190 = pneg %p63
        %p191 = pneg %p60
        %p192 = pneg %p84
        %p193 = pneg %p81
        %p194 = pneg %p110
        %p195 = pneg %p107
        %s196 = sand.u32 %s97, 1
        %s197 = scalar_lea.sflag [#allocation4], %s196
        %s198 = sand.u32 %s97, 1
        %s199 = smul.addr %s198, 8
        %s200 = scalar_lea.vmem [#allocation7], %s199
        %v202 = vld [vmem:[%s174] sm:$0xff]
        %v203 = vpack.c.bf16 %v202, %v202
        %v204 = vld [vmem:[#allocation5] sm:$0xf]
        %v205 = vld [vmem:[#allocation5 + $0x4] sm:$0xf]
        %v206 = vld [vmem:[#allocation5 + $0x8] sm:$0xf]
        %v207 = vld [vmem:[#allocation5 + $0xc] sm:$0xf]
        %v208 = vld [vmem:[%s2] sm:$0x1]
        %v210 = vlaneseq
        %v211 = vshrl.u32 %v210, 7
        %v212 = vsub.s32 0, %v211
        %v213 = vrot.slane %v208, %v212
        %v219 = vunpack.c.l.b16 %v204
        %v220 = vunpack.c.l.b16 %v205
        %v221 = vunpack.c.l.b16 %v206
        %v222 = vunpack.c.l.b16 %v207
        %v223 = vpack.c.b16 %v220, %v219
        %v224 = vpack.c.b16 %v222, %v221
        %vm227 = vcmask 261120
        %v229 = vsel %vm227, %v203, 0
        %231 = vmatprep.subr.bf16.mxu0 0
        %232 = vmatpush1.bf16.msra.mxu0 0
        %233 = vmatprep.subr.bf16.mxu0 0
        %234 = vmatpush1.bf16.msra.mxu0 0
        %235 = vmatprep.subr.bf16.mxu0 0
        %236 = vmatpush1.bf16.msra.mxu0 0
        %237 = vmatprep.subr.bf16.mxu0 0
        %238 = vmatpush1.bf16.msra.mxu0 0
        %239 = vmatprep.subr.bf16.mxu0 0
        %240 = vmatpush1.bf16.msra.mxu0 0
        %241 = vmatprep.subr.bf16.mxu0 0
        %242 = vmatpush1.bf16.msra.mxu0 0
        %243 = vmatprep.subr.bf16.mxu0 0
        %244 = vmatpush1.bf16.msra.mxu0 %v224
        %245 = vmatprep.subr.bf16.mxu0 0
        %246 = vmatpush1.bf16.msra.mxu0 %v223
        %247 = vmatprep.subr.bf16.mxu0 0
        %248 = vmatpush2.bf16.msra.mxu0 0
        %249 = vmatprep.subr.bf16.mxu0 0
        %250 = vmatpush2.bf16.msra.mxu0 0
        %251 = vmatprep.subr.bf16.mxu0 0
        %252 = vmatpush2.bf16.msra.mxu0 0
        %253 = vmatprep.subr.bf16.mxu0 0
        %254 = vmatpush2.bf16.msra.mxu0 0
        %255 = vmatprep.subr.bf16.mxu0 0
        %256 = vmatpush2.bf16.msra.mxu0 0
        %257 = vmatprep.subr.bf16.mxu0 0
        %258 = vmatpush2.bf16.msra.mxu0 0
        %259 = vmatprep.subr.bf16.mxu0 0
        %260 = vmatpush2.bf16.msra.mxu0 0
        %261 = vmatprep.subr.bf16.mxu0 0
        %262 = vmatpush2.bf16.msra.mxu0 0
        %263 = vmatprep.mubr.bf16.mxu0 0
        %264 = vmatmul.mubr.bf16.gmra.mxu0 %v229
        %v265 = vpop.f32.mrf.mxu0
        %v266 = vadd.f32 %v213, %v265
        %v267 = vpop.f32.mrf.mxu0
        %v268 = vpop.f32.mrf.mxu0
        %v269 = vpop.f32.mrf.mxu0
        %270 = vdwg.mxu0
        %vm271 = vcmask 523264
        %272 = vst.msk [vmem:[%s200] sm:$0xff] %vm271, %v266
        %s273 = sand.u32 %s97, 1
        %s274 = scalar_lea.sflag [#allocation4], %s273
        %s275 = sand.u32 %s97, 1
        %s276 = smul.addr %s275, 8
        %s277 = scalar_lea.vmem [#allocation7], %s276
        // Predicated region
        $region41: #{tpu_custom_call.1} parent=31 // pred_check
          %p278 = pneg %p107
        $region42: #{tpu_custom_call.1} parent=31 // pred_check_branch
          %280 = sbr.rel (%p278) target = $region44
        $region43: #{tpu_custom_call.1} parent=31 // pred_region
          %s282 = ssub.s32 128, 128
          %283 = vsyncadd %s274, %s282
          %s284 = smul.addr %s21, 128
          %s285 = scalar_lea.hbm %s3, %s284
          %s287 = sshll.u32 %s277, 4
          %s288 = int_to_ptr.vmem [resolvable:$true] %s287
          %290 = dma.vmem_to_hbm [thread:$0]  %s288, 128, %s285, %s274
        $region44: #{tpu_custom_call.1} parent=31 // pred_fallthru
          _
      $region32: #{tpu_custom_call.1} parent=5 // pred_fallthru
        _
      %p291 = scmp.le.s32.totalorder 2, %s16
      // Predicated region
      $region45: #{tpu_custom_call.1} parent=5 // pred_check
        %p292 = pneg %p291
      $region46: #{tpu_custom_call.1} parent=5 // pred_check_branch
        %294 = sbr.rel (%p292) target = $region48
      $region47: #{tpu_custom_call.1} parent=5 // pred_region
        %s295 = ssub.s32 %s16, 2
        // Predicated region
        $region49: #{tpu_custom_call.1} parent=47 // pred_check
          %p296 = pneg %p113
        $region50: #{tpu_custom_call.1} parent=47 // pred_check_branch
          %298 = sbr.rel (%p296) target = $region52
        $region51: #{tpu_custom_call.1} parent=47 // pred_region
          %s299 = sand.u32 %s98, 1
          %s300 = scalar_lea.sflag [#allocation4], %s299
          %s301 = sand.u32 %s98, 1
          %s302 = smul.addr %s301, 8
          %s303 = scalar_lea.vmem [#allocation7], %s302
          %304 = dma.done %s300, 128
        $region52: #{tpu_custom_call.1} parent=47 // pred_fallthru
          _
      $region48: #{tpu_custom_call.1} parent=5 // pred_fallthru
        _
    $region6: #{tpu_custom_call.1} parent=1 // loop_footer
      %s20 = sadd.s32 1, %s16
    $region7: #{tpu_custom_call.1} parent=1 // loop_footer_branch
      %15 = sbr.rel target = $region3
    $region8: #{tpu_custom_call.1} parent=1 // loop_exit
      _
    %305 = vsyncpa [#allocation3], 1
    %s306 = scalar_lea.sflag [#allocation3], 1
    %307 = vsyncpa %s306, 1
    %308 = vsyncpa [#allocation6], 1
    %309 = vsyncpa [#allocation4], 1
    %s310 = scalar_lea.sflag [#allocation4], 1
    %311 = vsyncpa %s310, 1

</llo_original>
